<compile_context>
chip_gen: v7x
topology: tpu7x:2x2x1
jax: 0.10.0
libtpu: 0.0.40
codegen_flags: <defaults>
</compile_context>

<pallas_src>
import functools

import jax
import jax.numpy as jnp
from jax.experimental import pallas as pl
from jax.experimental.pallas import tpu as pltpu


# ---------------------------------------------------------------------------
# Buffer construction (mirrors Depth2PointCloud.__init__; module assumes W == H).
# ---------------------------------------------------------------------------
def make_xyzs(W, H, f, sensor_h, sensor_w, dtype=jnp.float32):
    """Reproduces the torch buffer: rows [xs, -ys, 1, 1], shape (4, W*H)."""
    fx = sensor_w / f
    fy = sensor_h / f
    xs = jnp.linspace(0.0, W - 1, W, dtype=dtype) / float(W - 1) * fx - fx / 2
    ys = jnp.linspace(0.0, H - 1, H, dtype=dtype) / float(H - 1) * fy - fy / 2
    xs_grid = jnp.broadcast_to(xs[None, :], (W, W))   # xs.view(1,1,1,W).repeat(1,1,W,1)
    ys_grid = jnp.broadcast_to(ys[:, None], (H, H))   # ys.view(1,1,H,1).repeat(1,1,1,H)
    ones = jnp.ones_like(xs_grid)
    xyzs = jnp.stack([xs_grid, -ys_grid, ones, ones], axis=0)   # (4, H, W)
    return xyzs.reshape(4, -1)                                   # (4, W*H)


# ---------------------------------------------------------------------------
# Kernels.
# ---------------------------------------------------------------------------
def _d2pc_gen_kernel(depth_ref, out_ref, *, tile, w_mask, w_shift,
                     x_scale, x_off, y_scale, y_off):
    """Rays generated in-kernel from the lane index (power-of-two W, W == H).

    depth_ref: (B, TILE)   one lane tile of depth for every batch element
    out_ref  : (B*4, TILE) rows [4b:4b+4] = [d*x, d*(-y), d, 1] for batch b
    """
    ot = out_ref.dtype
    n = jax.lax.broadcasted_iota(jnp.int32, (1, tile), 1) + pl.program_id(0) * tile
    col = jnp.bitwise_and(n, w_mask)          # n % W   (W power of two)
    row = jnp.right_shift(n, w_shift)         # n // W
    x = (col.astype(jnp.float32) * x_scale + x_off).astype(ot)    #  xs[col]
    ny = (row.astype(jnp.float32) * y_scale + y_off).astype(ot)   # -ys[row]
    ones = jnp.ones((1, tile), dtype=ot)      # hoisted: built once per tile
    for b in range(depth_ref.shape[0]):       # B is small & static -> unrolled row stores
        d = depth_ref[b:b + 1, :].astype(ot)
        out_ref[4 * b + 0:4 * b + 1, :] = d * x
        out_ref[4 * b + 1:4 * b + 2, :] = d * ny
        out_ref[4 * b + 2:4 * b + 3, :] = d        # xyzs row 2 is all ones
        out_ref[4 * b + 3:4 * b + 4, :] = ones     # pts[:, -1, :] = 1


def _d2pc_xy_kernel(depth_ref, xy_ref, out_ref):
    """Fallback: streams the precomputed [x, -y] rows (non-power-of-two W).

    depth_ref: (B, TILE); xy_ref: (2, TILE); out_ref: (B*4, TILE).
    """
    ot = out_ref.dtype
    xy = xy_ref[...].astype(ot)                      # (2, TILE)
    ones = jnp.ones((1, xy.shape[1]), dtype=ot)
    for b in range(depth_ref.shape[0]):
        d = depth_ref[b:b + 1, :].astype(ot)
        out_ref[4 * b:4 * b + 2, :] = d * xy         # channels 0, 1
        out_ref[4 * b + 2:4 * b + 3, :] = d          # channel 2
        out_ref[4 * b + 3:4 * b + 4, :] = ones       # channel 3
    # TODO(synk): optionally add pipeline_mode=pl.Buffered(3) on out_specs for v5e and sweep.


# ---------------------------------------------------------------------------
# Tiling.
# ---------------------------------------------------------------------------
_MAX_TILE = 65536          # lanes per grid step (review: 32K-64K reaches the HBM roofline)
_VMEM_BUDGET = 12 << 20    # double-buffered working-set target (fits every generation)
_VMEM_LIMIT = 32 << 20     # explicit scoped-VMEM limit (raises v5e's 16 MiB default)
_SMALL_N = 2048            # below this a fused XLA elementwise op beats any pallas_call


def _round_up(x, m):
    return -(-x // m) * m


def _choose_tile(N, B, *, streams_xy):
    """Largest 128-multiple tile that divides N and fits the sublane-padded VMEM budget."""
    # Physical (8,128)-tiled bytes per lane: depth (B -> 8 sublanes) + optional xy (2 -> 8)
    # + output (4B rounded up to 8), each double-buffered by the pipeline.
    lane_bytes = (_round_up(B, 8) + (8 if streams_xy else 0) + _round_up(4 * B, 8)) * 4
    cap = max(128, min(_MAX_TILE, _VMEM_BUDGET // (2 * lane_bytes)) // 128 * 128)
    if N >= 32768:   # keep >= 2 grid steps so both TCs get work on megacore / v7x
        cap = min(cap, max(128, (N // 2) // 128 * 128))
    t = max(128, min(cap, N) // 128 * 128)
    while t > 128 and N % t != 0:     # exact divisor -> no partial blocks, no padding
        t -= 128
    return t


# ---------------------------------------------------------------------------
# Module wrapper.
# ---------------------------------------------------------------------------
class Depth2PointCloud:
    """JAX / Pallas-TPU port of the PyTorch Depth2PointCloud module."""

    def __init__(self, W=256, H=256, f=10, sensor_h=16, sensor_w=16, Normalize=False):
        self.W, self.H, self.N = W, H, W * H
        self.fx = sensor_w / f
        self.fy = sensor_h / f
        # Same buffer as the torch module (used by the fast path / non-pow2 fallback);
        # the [x, -y] rows are sliced ONCE here so the hot path never re-slices per call.
        self.xyzs = make_xyzs(W, H, f, sensor_h, sensor_w)      # (4, N) float32
        self._xy = self.xyzs[:2]                                # (2, N) float32
        self._pow2_square = (W == H) and (W > 1) and (W & (W - 1) == 0)

    @staticmethod
    def _as_b1n(depth):
        # Mirrors the torch forward's view chain.
        if depth.ndim == 2:
            depth = depth.reshape(1, 1, *depth.shape)
        if depth.ndim == 3:
            depth = depth[:, None]
        if depth.ndim == 4:
            depth = depth.reshape(depth.shape[0], 1, -1)
        return depth

    def __call__(self, depth):
        depth = self._as_b1n(depth)
        B, _, N = depth.shape
        assert N == self.N, f"depth has {N} points but module was built for {self.N}"
        out_dtype = jnp.promote_types(depth.dtype, jnp.float32)
        depth2d = depth.reshape(B, N)

        # Small or non-lane-aligned N: one fused XLA elementwise op is already at the HBM
        # roofline; skipping pallas avoids launch overhead and any pad / slice traffic.
        if N < _SMALL_N or N % 128 != 0:
            pts = depth2d[:, None, :].astype(out_dtype) * self.xyzs[None].astype(out_dtype)
            return pts.at[:, -1, :].set(jnp.asarray(1, out_dtype))

        streams_xy = not self._pow2_square
        tile = _choose_tile(N, B, streams_xy=streams_xy)
        grid = (N // tile,)

        if streams_xy:
            kernel = _d2pc_xy_kernel
            in_specs = [pl.BlockSpec((B, tile), lambda n: (0, n)),      # depth tile
                        pl.BlockSpec((2, tile), lambda n: (0, n))]      # [x, -y] tile
            args = (depth2d, self._xy)
        else:
            kernel = functools.partial(
                _d2pc_gen_kernel, tile=tile,
                w_mask=self.W - 1, w_shift=self.W.bit_length() - 1,
                x_scale=self.fx / float(self.W - 1), x_off=-self.fx / 2.0,
                y_scale=-self.fy / float(self.H - 1), y_off=self.fy / 2.0)
            in_specs = [pl.BlockSpec((B, tile), lambda n: (0, n))]      # depth tile only
            args = (depth2d,)

        out = pl.pallas_call(
            kernel,
            out_shape=jax.ShapeDtypeStruct((4 * B, N), out_dtype),      # lane-dense slab
            grid_spec=pltpu.PrefetchScalarGridSpec(
                num_scalar_prefetch=0,
                grid=grid,
                in_specs=in_specs,
                out_specs=pl.BlockSpec((4 * B, tile), lambda n: (0, n)),
            ),
            compiler_params=pltpu.CompilerParams(
                dimension_semantics=("parallel",),       # megacore / v7x 2-TC sharding
                vmem_limit_bytes=_VMEM_LIMIT,
            ),
        )(*args)

        return out.reshape(B, 4, N)     # contiguous -> free view back to (B, 4, N)


# ---------------------------------------------------------------------------
# Pure-JAX reference (mirrors the PyTorch forward) and self-test.
# ---------------------------------------------------------------------------
def _reference(depth, xyzs):
    depth = Depth2PointCloud._as_b1n(depth)
    pts = depth.astype(jnp.float32) * xyzs[None].astype(jnp.float32)
    return pts.at[:, -1, :].set(1.0)


if __name__ == "__main__":
    key = jax.random.PRNGKey(0)
    k1, k2, k3 = jax.random.split(key, 3)
    f, sensor_h, sensor_w = 10.0, 16.0, 16.0

    # Case 1: Pallas path, in-kernel ray generation (W power of two), batch = 2.
    W1 = H1 = 64
    m1 = Depth2PointCloud(W=W1, H=H1, f=f, sensor_h=sensor_h, sensor_w=sensor_w)
    d1 = jax.random.uniform(k1, (2, 1, W1, H1), jnp.float32, 0.5, 5.0)
    p1 = jax.block_until_ready(m1(d1))
    r1 = _reference(d1, m1.xyzs)
    assert p1.shape == (2, 4, W1 * H1)
    assert jnp.allclose(p1, r1, atol=1e-5, rtol=1e-5), float(jnp.max(jnp.abs(p1 - r1)))

    # Case 2: Pallas path streaming the precomputed xy rows (W not a power of two), batch = 1.
    W2 = H2 = 48                                  # N = 2304 (multiple of 128)
    m2 = Depth2PointCloud(W=W2, H=H2, f=f, sensor_h=sensor_h, sensor_w=sensor_w)
    d2 = jax.random.uniform(k2, (1, 1, W2, H2), jnp.float32, 0.5, 5.0)
    p2 = jax.block_until_ready(m2(d2))
    r2 = _reference(d2, m2.xyzs)
    assert p2.shape == (1, 4, W2 * H2)
    assert jnp.allclose(p2, r2, atol=1e-5, rtol=1e-5), float(jnp.max(jnp.abs(p2 - r2)))

    # Case 3: small-N fast path (module-scale tiny test size), batch = 2.
    W3 = H3 = 16
    m3 = Depth2PointCloud(W=W3, H=H3, f=f, sensor_h=sensor_h, sensor_w=sensor_w)
    d3 = jax.random.uniform(k3, (2, 1, W3, H3), jnp.float32, 0.5, 5.0)
    p3 = jax.block_until_ready(m3(d3))
    r3 = _reference(d3, m3.xyzs)
    assert p3.shape == (2, 4, W3 * H3)
    assert jnp.allclose(p3, r3, atol=1e-6, rtol=1e-6)

    print("KERNEL_OK")
</pallas_src>

<mosaic_0001>
module attributes {stable_mosaic.version = 11 : i64} {
  func.func @_d2pc_gen_kernel(%arg0: i32, %arg1: memref<2x4096xf32, #tpu.memory_space<vmem>>, %arg2: memref<8x4096xf32, #tpu.memory_space<vmem>>) attributes {dimension_semantics = [#tpu.dimension_semantics<parallel>], iteration_bounds = array<i64: 1>, scalar_prefetch = 0 : i64, scratch_operands = 0 : i64, tpu.core_type = #tpu.core_type<tc>, window_params = [{transform_indices = @transform_0, window_bounds = array<i64: 2, 4096>}, {transform_indices = @transform_1, window_bounds = array<i64: 8, 4096>}]} {
    %0 = tpu.iota {dimensions = array<i32: 1>} : vector<1x4096xi32>
    %c4096_i32 = arith.constant 4096 : i32
    %1 = arith.muli %arg0, %c4096_i32 : i32
    %2 = vector.broadcast %1 : i32 to vector<1x4096xi32>
    %3 = arith.addi %0, %2 : vector<1x4096xi32>
    %c63_i32 = arith.constant 63 : i32
    %4 = vector.broadcast %c63_i32 : i32 to vector<1x4096xi32>
    %5 = arith.andi %3, %4 : vector<1x4096xi32>
    %c6_i32 = arith.constant 6 : i32
    %6 = vector.broadcast %c6_i32 : i32 to vector<1x4096xi32>
    %7 = arith.shrsi %3, %6 : vector<1x4096xi32>
    %8 = arith.sitofp %5 : vector<1x4096xi32> to vector<1x4096xf32>
    %cst = arith.constant 0.0253968257 : f32
    %9 = vector.broadcast %cst : f32 to vector<1x4096xf32>
    %10 = arith.mulf %8, %9 : vector<1x4096xf32>
    %cst_0 = arith.constant -8.000000e-01 : f32
    %11 = vector.broadcast %cst_0 : f32 to vector<1x4096xf32>
    %12 = arith.addf %10, %11 : vector<1x4096xf32>
    %13 = arith.sitofp %7 : vector<1x4096xi32> to vector<1x4096xf32>
    %cst_1 = arith.constant -0.0253968257 : f32
    %14 = vector.broadcast %cst_1 : f32 to vector<1x4096xf32>
    %15 = arith.mulf %13, %14 : vector<1x4096xf32>
    %cst_2 = arith.constant 8.000000e-01 : f32
    %16 = vector.broadcast %cst_2 : f32 to vector<1x4096xf32>
    %17 = arith.addf %15, %16 : vector<1x4096xf32>
    %cst_3 = arith.constant 1.000000e+00 : f32
    %18 = vector.broadcast %cst_3 : f32 to vector<1x4096xf32>
    %c0 = arith.constant 0 : index
    %c0_4 = arith.constant 0 : index
    %19 = vector.load %arg1[%c0, %c0_4] : memref<2x4096xf32, #tpu.memory_space<vmem>>, vector<1x4096xf32>
    %20 = arith.mulf %19, %12 : vector<1x4096xf32>
    %c0_5 = arith.constant 0 : index
    %c0_6 = arith.constant 0 : index
    %21 = vector.load %arg2[%c0_5, %c0_6] : memref<8x4096xf32, #tpu.memory_space<vmem>>, vector<1x4096xf32>
    tpu.vector_store %arg2[%c0_5, %c0_6], %20 {strides = array<i32>} : memref<8x4096xf32, #tpu.memory_space<vmem>>, vector<1x4096xf32>,
    %22 = arith.mulf %19, %17 : vector<1x4096xf32>
    %c1 = arith.constant 1 : index
    %c0_7 = arith.constant 0 : index
    %23 = vector.load %arg2[%c1, %c0_7] : memref<8x4096xf32, #tpu.memory_space<vmem>>, vector<1x4096xf32>
    tpu.vector_store %arg2[%c1, %c0_7], %22 {strides = array<i32>} : memref<8x4096xf32, #tpu.memory_space<vmem>>, vector<1x4096xf32>,
    %c2 = arith.constant 2 : index
    %c0_8 = arith.constant 0 : index
    %24 = vector.load %arg2[%c2, %c0_8] : memref<8x4096xf32, #tpu.memory_space<vmem>>, vector<1x4096xf32>
    tpu.vector_store %arg2[%c2, %c0_8], %19 {strides = array<i32>} : memref<8x4096xf32, #tpu.memory_space<vmem>>, vector<1x4096xf32>,
    %c3 = arith.constant 3 : index
    %c0_9 = arith.constant 0 : index
    %25 = vector.load %arg2[%c3, %c0_9] : memref<8x4096xf32, #tpu.memory_space<vmem>>, vector<1x4096xf32>
    tpu.vector_store %arg2[%c3, %c0_9], %18 {strides = array<i32>} : memref<8x4096xf32, #tpu.memory_space<vmem>>, vector<1x4096xf32>,
    %c1_10 = arith.constant 1 : index
    %c0_11 = arith.constant 0 : index
    %26 = vector.load %arg1[%c1_10, %c0_11] : memref<2x4096xf32, #tpu.memory_space<vmem>>, vector<1x4096xf32>
    %27 = arith.mulf %26, %12 : vector<1x4096xf32>
    %c4 = arith.constant 4 : index
    %c0_12 = arith.constant 0 : index
    %28 = vector.load %arg2[%c4, %c0_12] : memref<8x4096xf32, #tpu.memory_space<vmem>>, vector<1x4096xf32>
    tpu.vector_store %arg2[%c4, %c0_12], %27 {strides = array<i32>} : memref<8x4096xf32, #tpu.memory_space<vmem>>, vector<1x4096xf32>,
    %29 = arith.mulf %26, %17 : vector<1x4096xf32>
    %c5 = arith.constant 5 : index
    %c0_13 = arith.constant 0 : index
    %30 = vector.load %arg2[%c5, %c0_13] : memref<8x4096xf32, #tpu.memory_space<vmem>>, vector<1x4096xf32>
    tpu.vector_store %arg2[%c5, %c0_13], %29 {strides = array<i32>} : memref<8x4096xf32, #tpu.memory_space<vmem>>, vector<1x4096xf32>,
    %c6 = arith.constant 6 : index
    %c0_14 = arith.constant 0 : index
    %31 = vector.load %arg2[%c6, %c0_14] : memref<8x4096xf32, #tpu.memory_space<vmem>>, vector<1x4096xf32>
    tpu.vector_store %arg2[%c6, %c0_14], %26 {strides = array<i32>} : memref<8x4096xf32, #tpu.memory_space<vmem>>, vector<1x4096xf32>,
    %c7 = arith.constant 7 : index
    %c0_15 = arith.constant 0 : index
    %32 = vector.load %arg2[%c7, %c0_15] : memref<8x4096xf32, #tpu.memory_space<vmem>>, vector<1x4096xf32>
    tpu.vector_store %arg2[%c7, %c0_15], %18 {strides = array<i32>} : memref<8x4096xf32, #tpu.memory_space<vmem>>, vector<1x4096xf32>,
    return
  }
  func.func @transform_0(%arg0: i32) -> (i32, i32) {
    %c0_i32 = arith.constant 0 : i32
    %c0_i32_0 = arith.constant 0 : i32
    return %c0_i32, %arg0 : i32, i32
  }
  func.func @transform_1(%arg0: i32) -> (i32, i32) {
    %c0_i32 = arith.constant 0 : i32
    %c0_i32_0 = arith.constant 0 : i32
    return %c0_i32, %arg0 : i32, i32
  }
}

</mosaic_0001>

<llo_original>
// kernel: tpu_custom_call.1
$region0: #{tpu_custom_call.1}
  #allocation0 [shape = 'u32[]', space=smem, size = 0x4, offset = 0x4, fixed_abs, tag = 'smem constant byte address 0x4 - core index']
  #allocation1 [shape = 'u32[144,128]{1,0:T(1,128)}', space=vmem, size = 0x12000, scoped, tag = 'internal scratch']
  %s0 = inlined_call_operand.hbm [shape: f32[2,4096], index: 0, kind: input, shape index: {}]
  %s1 = inlined_call_operand.hbm [shape: f32[8,4096], index: 1, kind: output, shape index: {}]
  %s2 = sld [smem:[#allocation0]]
  $region18: #{tpu_custom_call.1} parent=0
    _
  %s4 = ssub.s32 1, %s2
  %s5 = scalar_select 0, %s4, %s2
  $region1: #{tpu_custom_call.1} parent=0
    #allocation2 [shape = 'u8[32768]{0}', space=vmem, size = 0x8000, scoped, tag = 'input window, operand 0, single buffered']
    #allocation3 [shape = 's32[1]{0}', space=sflag, size = 0x4, scoped, tag = 'scoped memory for tpu_custom_call.1']
    #allocation4 [shape = 's32[1]{0}', space=sflag, size = 0x4, scoped, tag = 'scoped memory for tpu_custom_call.1']
    #allocation5 [shape = 'u8[131072]{0}', space=vmem, size = 0x20000, scoped, tag = 'output window, operand 0, single buffered']
    %6 = vsyncpa [#allocation3], 0
    %7 = vsyncpa [#allocation4], 0
    // Predicated region
    $region2: #{tpu_custom_call.1} parent=1 // pred_check
      _
    $region3: #{tpu_custom_call.1} parent=1 // pred_check_branch
      %9 = sbr.rel (0) target = $region5
    $region4: #{tpu_custom_call.1} parent=1 // pred_region
      %s11 = ssub.s32 1024, 1024
      %12 = vsyncadd [#allocation3], %s11
      %s14 = sshll.u32 [#allocation2], 4
      %s15 = int_to_ptr.vmem [resolvable:$true] %s14
      %17 = dma.hbm_to_vmem [thread:$0]  %s0, 1024, %s15, [#allocation3]
    $region5: #{tpu_custom_call.1} parent=1 // pred_fallthru
      _
    // Predicated region
    $region6: #{tpu_custom_call.1} parent=1 // pred_check
      _
    $region7: #{tpu_custom_call.1} parent=1 // pred_check_branch
      %19 = sbr.rel (0) target = $region9
    $region8: #{tpu_custom_call.1} parent=1 // pred_region
      %20 = dma.done [#allocation3], 1024
    $region9: #{tpu_custom_call.1} parent=1 // pred_fallthru
      _
    %v21 = vlaneseq
    %v22 = vand.u32 %v21, 127
    %v23 = vadd.s32 %v22, 128
    %v24 = vadd.s32 %v22, 256
    %v25 = vadd.s32 %v22, 384
    %v26 = vadd.s32 %v22, 512
    %v27 = vadd.s32 %v22, 640
    %v28 = vadd.s32 %v22, 768
    %v29 = vadd.s32 %v22, 896
    %v30 = vadd.s32 %v22, 1024
    %v31 = vadd.s32 %v22, 1152
    %v32 = vadd.s32 %v22, 1280
    %v33 = vadd.s32 %v22, 1408
    %v34 = vadd.s32 %v22, 1536
    %v35 = vadd.s32 %v22, 1664
    %v36 = vadd.s32 %v22, 1792
    %v37 = vadd.s32 %v22, 1920
    %v38 = vadd.s32 %v22, 2048
    %v39 = vadd.s32 %v22, 2176
    %v40 = vadd.s32 %v22, 2304
    %v41 = vadd.s32 %v22, 2432
    %v42 = vadd.s32 %v22, 2560
    %v43 = vadd.s32 %v22, 2688
    %v44 = vadd.s32 %v22, 2816
    %v45 = vadd.s32 %v22, 2944
    %v46 = vadd.s32 %v22, 3072
    %v47 = vadd.s32 %v22, 3200
    %v48 = vadd.s32 %v22, 3328
    %v49 = vadd.s32 %v22, 3456
    %v50 = vadd.s32 %v22, 3584
    %v51 = vadd.s32 %v22, 3712
    %v52 = vadd.s32 %v22, 3840
    %v53 = vadd.s32 %v22, 3968
    %s54 = smul.u32 0, 4096
    %v55 = vstv %s54
    %v56 = vadd.s32 %v22, %v55
    %v57 = vadd.s32 %v23, %v55
    %v58 = vadd.s32 %v24, %v55
    %v59 = vadd.s32 %v25, %v55
    %v60 = vadd.s32 %v26, %v55
    %v61 = vadd.s32 %v27, %v55
    %v62 = vadd.s32 %v28, %v55
    %v63 = vadd.s32 %v29, %v55
    %v64 = vadd.s32 %v30, %v55
    %v65 = vadd.s32 %v31, %v55
    %v66 = vadd.s32 %v32, %v55
    %v67 = vadd.s32 %v33, %v55
    %v68 = vadd.s32 %v34, %v55
    %v69 = vadd.s32 %v35, %v55
    %v70 = vadd.s32 %v36, %v55
    %v71 = vadd.s32 %v37, %v55
    %v72 = vadd.s32 %v38, %v55
    %v73 = vadd.s32 %v39, %v55
    %v74 = vadd.s32 %v40, %v55
    %v75 = vadd.s32 %v41, %v55
    %v76 = vadd.s32 %v42, %v55
    %v77 = vadd.s32 %v43, %v55
    %v78 = vadd.s32 %v44, %v55
    %v79 = vadd.s32 %v45, %v55
    %v80 = vadd.s32 %v46, %v55
    %v81 = vadd.s32 %v47, %v55
    %v82 = vadd.s32 %v48, %v55
    %v83 = vadd.s32 %v49, %v55
    %v84 = vadd.s32 %v50, %v55
    %v85 = vadd.s32 %v51, %v55
    %v86 = vadd.s32 %v52, %v55
    %v87 = vadd.s32 %v53, %v55
    %v88 = vand.u32 %v56, 63
    %v89 = vand.u32 %v57, 63
    %v90 = vand.u32 %v58, 63
    %v91 = vand.u32 %v59, 63
    %v92 = vand.u32 %v60, 63
    %v93 = vand.u32 %v61, 63
    %v94 = vand.u32 %v62, 63
    %v95 = vand.u32 %v63, 63
    %v96 = vand.u32 %v64, 63
    %v97 = vand.u32 %v65, 63
    %v98 = vand.u32 %v66, 63
    %v99 = vand.u32 %v67, 63
    %v100 = vand.u32 %v68, 63
    %v101 = vand.u32 %v69, 63
    %v102 = vand.u32 %v70, 63
    %v103 = vand.u32 %v71, 63
    %v104 = vand.u32 %v72, 63
    %v105 = vand.u32 %v73, 63
    %v106 = vand.u32 %v74, 63
    %v107 = vand.u32 %v75, 63
    %v108 = vand.u32 %v76, 63
    %v109 = vand.u32 %v77, 63
    %v110 = vand.u32 %v78, 63
    %v111 = vand.u32 %v79, 63
    %v112 = vand.u32 %v80, 63
    %v113 = vand.u32 %v81, 63
    %v114 = vand.u32 %v82, 63
    %v115 = vand.u32 %v83, 63
    %v116 = vand.u32 %v84, 63
    %v117 = vand.u32 %v85, 63
    %v118 = vand.u32 %v86, 63
    %v119 = vand.u32 %v87, 63
    %v120 = vshra.s32 %v56, 6
    %v121 = vshra.s32 %v57, 6
    %v122 = vshra.s32 %v58, 6
    %v123 = vshra.s32 %v59, 6
    %v124 = vshra.s32 %v60, 6
    %v125 = vshra.s32 %v61, 6
    %v126 = vshra.s32 %v62, 6
    %v127 = vshra.s32 %v63, 6
    %v128 = vshra.s32 %v64, 6
    %v129 = vshra.s32 %v65, 6
    %v130 = vshra.s32 %v66, 6
    %v131 = vshra.s32 %v67, 6
    %v132 = vshra.s32 %v68, 6
    %v133 = vshra.s32 %v69, 6
    %v134 = vshra.s32 %v70, 6
    %v135 = vshra.s32 %v71, 6
    %v136 = vshra.s32 %v72, 6
    %v137 = vshra.s32 %v73, 6
    %v138 = vshra.s32 %v74, 6
    %v139 = vshra.s32 %v75, 6
    %v140 = vshra.s32 %v76, 6
    %v141 = vshra.s32 %v77, 6
    %v142 = vshra.s32 %v78, 6
    %v143 = vshra.s32 %v79, 6
    %v144 = vshra.s32 %v80, 6
    %v145 = vshra.s32 %v81, 6
    %v146 = vshra.s32 %v82, 6
    %v147 = vshra.s32 %v83, 6
    %v148 = vshra.s32 %v84, 6
    %v149 = vshra.s32 %v85, 6
    %v150 = vshra.s32 %v86, 6
    %v151 = vshra.s32 %v87, 6
    %v152 = vcvt.s32.f32 %v88
    %v153 = vcvt.s32.f32 %v89
    %v154 = vcvt.s32.f32 %v90
    %v155 = vcvt.s32.f32 %v91
    %v156 = vcvt.s32.f32 %v92
    %v157 = vcvt.s32.f32 %v93
    %v158 = vcvt.s32.f32 %v94
    %v159 = vcvt.s32.f32 %v95
    %v160 = vcvt.s32.f32 %v96
    %v161 = vcvt.s32.f32 %v97
    %v162 = vcvt.s32.f32 %v98
    %v163 = vcvt.s32.f32 %v99
    %v164 = vcvt.s32.f32 %v100
    %v165 = vcvt.s32.f32 %v101
    %v166 = vcvt.s32.f32 %v102
    %v167 = vcvt.s32.f32 %v103
    %v168 = vcvt.s32.f32 %v104
    %v169 = vcvt.s32.f32 %v105
    %v170 = vcvt.s32.f32 %v106
    %v171 = vcvt.s32.f32 %v107
    %v172 = vcvt.s32.f32 %v108
    %v173 = vcvt.s32.f32 %v109
    %v174 = vcvt.s32.f32 %v110
    %v175 = vcvt.s32.f32 %v111
    %v176 = vcvt.s32.f32 %v112
    %v177 = vcvt.s32.f32 %v113
    %v178 = vcvt.s32.f32 %v114
    %v179 = vcvt.s32.f32 %v115
    %v180 = vcvt.s32.f32 %v116
    %v181 = vcvt.s32.f32 %v117
    %v182 = vcvt.s32.f32 %v118
    %v183 = vcvt.s32.f32 %v119
    %v184 = vmul.f32 %v152, 0.025396826
    %v185 = vmul.f32 %v153, 0.025396826
    %v186 = vmul.f32 %v154, 0.025396826
    %v187 = vmul.f32 %v155, 0.025396826
    %v188 = vmul.f32 %v156, 0.025396826
    %v189 = vmul.f32 %v157, 0.025396826
    %v190 = vmul.f32 %v158, 0.025396826
    %v191 = vmul.f32 %v159, 0.025396826
    %v192 = vmul.f32 %v160, 0.025396826
    %v193 = vmul.f32 %v161, 0.025396826
    %v194 = vmul.f32 %v162, 0.025396826
    %v195 = vmul.f32 %v163, 0.025396826
    %v196 = vmul.f32 %v164, 0.025396826
    %v197 = vmul.f32 %v165, 0.025396826
    %v198 = vmul.f32 %v166, 0.025396826
    %v199 = vmul.f32 %v167, 0.025396826
    %v200 = vmul.f32 %v168, 0.025396826
    %v201 = vmul.f32 %v169, 0.025396826
    %v202 = vmul.f32 %v170, 0.025396826
    %v203 = vmul.f32 %v171, 0.025396826
    %v204 = vmul.f32 %v172, 0.025396826
    %v205 = vmul.f32 %v173, 0.025396826
    %v206 = vmul.f32 %v174, 0.025396826
    %v207 = vmul.f32 %v175, 0.025396826
    %v208 = vmul.f32 %v176, 0.025396826
    %v209 = vmul.f32 %v177, 0.025396826
    %v210 = vmul.f32 %v178, 0.025396826
    %v211 = vmul.f32 %v179, 0.025396826
    %v212 = vmul.f32 %v180, 0.025396826
    %v213 = vmul.f32 %v181, 0.025396826
    %v214 = vmul.f32 %v182, 0.025396826
    %v215 = vmul.f32 %v183, 0.025396826
    %v216 = vadd.f32 %v184, -0.8
    %v217 = vadd.f32 %v185, -0.8
    %v218 = vadd.f32 %v186, -0.8
    %v219 = vadd.f32 %v187, -0.8
    %v220 = vadd.f32 %v188, -0.8
    %v221 = vadd.f32 %v189, -0.8
    %v222 = vadd.f32 %v190, -0.8
    %v223 = vadd.f32 %v191, -0.8
    %v224 = vadd.f32 %v192, -0.8
    %v225 = vadd.f32 %v193, -0.8
    %v226 = vadd.f32 %v194, -0.8
    %v227 = vadd.f32 %v195, -0.8
    %v228 = vadd.f32 %v196, -0.8
    %v229 = vadd.f32 %v197, -0.8
    %v230 = vadd.f32 %v198, -0.8
    %v231 = vadd.f32 %v199, -0.8
    %v232 = vadd.f32 %v200, -0.8
    %v233 = vadd.f32 %v201, -0.8
    %v234 = vadd.f32 %v202, -0.8
    %v235 = vadd.f32 %v203, -0.8
    %v236 = vadd.f32 %v204, -0.8
    %v237 = vadd.f32 %v205, -0.8
    %v238 = vadd.f32 %v206, -0.8
    %v239 = vadd.f32 %v207, -0.8
    %v240 = vadd.f32 %v208, -0.8
    %v241 = vadd.f32 %v209, -0.8
    %v242 = vadd.f32 %v210, -0.8
    %v243 = vadd.f32 %v211, -0.8
    %v244 = vadd.f32 %v212, -0.8
    %v245 = vadd.f32 %v213, -0.8
    %v246 = vadd.f32 %v214, -0.8
    %v247 = vadd.f32 %v215, -0.8
    %v248 = vcvt.s32.f32 %v120
    %v249 = vcvt.s32.f32 %v121
    %v250 = vcvt.s32.f32 %v122
    %v251 = vcvt.s32.f32 %v123
    %v252 = vcvt.s32.f32 %v124
    %v253 = vcvt.s32.f32 %v125
    %v254 = vcvt.s32.f32 %v126
    %v255 = vcvt.s32.f32 %v127
    %v256 = vcvt.s32.f32 %v128
    %v257 = vcvt.s32.f32 %v129
    %v258 = vcvt.s32.f32 %v130
    %v259 = vcvt.s32.f32 %v131
    %v260 = vcvt.s32.f32 %v132
    %v261 = vcvt.s32.f32 %v133
    %v262 = vcvt.s32.f32 %v134
    %v263 = vcvt.s32.f32 %v135
    %v264 = vcvt.s32.f32 %v136
    %v265 = vcvt.s32.f32 %v137
    %v266 = vcvt.s32.f32 %v138
    %v267 = vcvt.s32.f32 %v139
    %v268 = vcvt.s32.f32 %v140
    %v269 = vcvt.s32.f32 %v141
    %v270 = vcvt.s32.f32 %v142
    %v271 = vcvt.s32.f32 %v143
    %v272 = vcvt.s32.f32 %v144
    %v273 = vcvt.s32.f32 %v145
    %v274 = vcvt.s32.f32 %v146
    %v275 = vcvt.s32.f32 %v147
    %v276 = vcvt.s32.f32 %v148
    %v277 = vcvt.s32.f32 %v149
    %v278 = vcvt.s32.f32 %v150
    %v279 = vcvt.s32.f32 %v151
    %v280 = vmul.f32 %v248, -0.025396826
    %v281 = vmul.f32 %v249, -0.025396826
    %v282 = vmul.f32 %v250, -0.025396826
    %v283 = vmul.f32 %v251, -0.025396826
    %v284 = vmul.f32 %v252, -0.025396826
    %v285 = vmul.f32 %v253, -0.025396826
    %v286 = vmul.f32 %v254, -0.025396826
    %v287 = vmul.f32 %v255, -0.025396826
    %v288 = vmul.f32 %v256, -0.025396826
    %v289 = vmul.f32 %v257, -0.025396826
    %v290 = vmul.f32 %v258, -0.025396826
    %v291 = vmul.f32 %v259, -0.025396826
    %v292 = vmul.f32 %v260, -0.025396826
    %v293 = vmul.f32 %v261, -0.025396826
    %v294 = vmul.f32 %v262, -0.025396826
    %v295 = vmul.f32 %v263, -0.025396826
    %v296 = vmul.f32 %v264, -0.025396826
    %v297 = vmul.f32 %v265, -0.025396826
    %v298 = vmul.f32 %v266, -0.025396826
    %v299 = vmul.f32 %v267, -0.025396826
    %v300 = vmul.f32 %v268, -0.025396826
    %v301 = vmul.f32 %v269, -0.025396826
    %v302 = vmul.f32 %v270, -0.025396826
    %v303 = vmul.f32 %v271, -0.025396826
    %v304 = vmul.f32 %v272, -0.025396826
    %v305 = vmul.f32 %v273, -0.025396826
    %v306 = vmul.f32 %v274, -0.025396826
    %v307 = vmul.f32 %v275, -0.025396826
    %v308 = vmul.f32 %v276, -0.025396826
    %v309 = vmul.f32 %v277, -0.025396826
    %v310 = vmul.f32 %v278, -0.025396826
    %v311 = vmul.f32 %v279, -0.025396826
    %v312 = vadd.f32 %v280, 0.8
    %v313 = vadd.f32 %v281, 0.8
    %v314 = vadd.f32 %v282, 0.8
    %v315 = vadd.f32 %v283, 0.8
    %v316 = vadd.f32 %v284, 0.8
    %v317 = vadd.f32 %v285, 0.8
    %v318 = vadd.f32 %v286, 0.8
    %v319 = vadd.f32 %v287, 0.8
    %v320 = vadd.f32 %v288, 0.8
    %v321 = vadd.f32 %v289, 0.8
    %v322 = vadd.f32 %v290, 0.8
    %v323 = vadd.f32 %v291, 0.8
    %v324 = vadd.f32 %v292, 0.8
    %v325 = vadd.f32 %v293, 0.8
    %v326 = vadd.f32 %v294, 0.8
    %v327 = vadd.f32 %v295, 0.8
    %v328 = vadd.f32 %v296, 0.8
    %v329 = vadd.f32 %v297, 0.8
    %v330 = vadd.f32 %v298, 0.8
    %v331 = vadd.f32 %v299, 0.8
    %v332 = vadd.f32 %v300, 0.8
    %v333 = vadd.f32 %v301, 0.8
    %v334 = vadd.f32 %v302, 0.8
    %v335 = vadd.f32 %v303, 0.8
    %v336 = vadd.f32 %v304, 0.8
    %v337 = vadd.f32 %v305, 0.8
    %v338 = vadd.f32 %v306, 0.8
    %v339 = vadd.f32 %v307, 0.8
    %v340 = vadd.f32 %v308, 0.8
    %v341 = vadd.f32 %v309, 0.8
    %v342 = vadd.f32 %v310, 0.8
    %v343 = vadd.f32 %v311, 0.8
    %v344 = vld [vmem:[#allocation2] ss:$2 sm:$0xff]
    %s345 = scalar_lea.vmem [#allocation2], 16
    %v346 = vld [vmem:[%s345] ss:$2 sm:$0xff]
    %s347 = scalar_lea.vmem [#allocation2], 32
    %v348 = vld [vmem:[%s347] ss:$2 sm:$0xff]
    %s349 = scalar_lea.vmem [#allocation2], 48
    %v350 = vld [vmem:[%s349] ss:$2 sm:$0xff]
    %v383 = vcombine.low %v216, %v217
    %v384 = vcombine.low %v218, %v219
    %v385 = vcombine.low %v220, %v221
    %v386 = vcombine.low %v222, %v223
    %v388 = vunpack.c.l.s4 1966171168
    %v389 = vunpack.c.0.s8 %v388
    %v390 = vlaneseq
    %v391 = vshrl.u32 %v390, 7
    %v392 = vsub.s32 %v389, %v391
    %v393 = vrot.slane %v383, %v392
    %v395 = vunpack.c.l.s4 1966171168
    %v396 = vunpack.c.0.s8 %v395
    %v397 = vlaneseq
    %v398 = vshrl.u32 %v397, 7
    %v399 = vsub.s32 %v396, %v398
    %v400 = vrot.slane %v384, %v399
    %v402 = vunpack.c.l.s4 1966171168
    %v403 = vunpack.c.0.s8 %v402
    %v404 = vlaneseq
    %v405 = vshrl.u32 %v404, 7
    %v406 = vsub.s32 %v403, %v405
    %v407 = vrot.slane %v385, %v406
    %v409 = vunpack.c.l.s4 1966171168
    %v410 = vunpack.c.0.s8 %v409
    %v411 = vlaneseq
    %v412 = vshrl.u32 %v411, 7
    %v413 = vsub.s32 %v410, %v412
    %v414 = vrot.slane %v386, %v413
    %v415 = vcombine.low %v393, %v400
    %v416 = vcombine.low %v407, %v414
    %v418 = vunpack.c.l.s4 1966171168
    %v419 = vunpack.c.0.s8 %v418
    %v420 = vlaneseq
    %v421 = vshrl.u32 %v420, 7
    %v422 = vsub.s32 %v419, %v421
    %v423 = vrot.slane %v415, %v422
    %v425 = vunpack.c.l.s4 1966171168
    %v426 = vunpack.c.0.s8 %v425
    %v427 = vlaneseq
    %v428 = vshrl.u32 %v427, 7
    %v429 = vsub.s32 %v426, %v428
    %v430 = vrot.slane %v416, %v429
    %v431 = vcombine.low %v423, %v430
    %v432 = vcombine.low %v224, %v225
    %v433 = vcombine.low %v226, %v227
    %v434 = vcombine.low %v228, %v229
    %v435 = vcombine.low %v230, %v231
    %v437 = vunpack.c.l.s4 1966171168
    %v438 = vunpack.c.0.s8 %v437
    %v439 = vlaneseq
    %v440 = vshrl.u32 %v439, 7
    %v441 = vsub.s32 %v438, %v440
    %v442 = vrot.slane %v432, %v441
    %v444 = vunpack.c.l.s4 1966171168
    %v445 = vunpack.c.0.s8 %v444
    %v446 = vlaneseq
    %v447 = vshrl.u32 %v446, 7
    %v448 = vsub.s32 %v445, %v447
    %v449 = vrot.slane %v433, %v448
    %v451 = vunpack.c.l.s4 1966171168
    %v452 = vunpack.c.0.s8 %v451
    %v453 = vlaneseq
    %v454 = vshrl.u32 %v453, 7
    %v455 = vsub.s32 %v452, %v454
    %v456 = vrot.slane %v434, %v455
    %v458 = vunpack.c.l.s4 1966171168
    %v459 = vunpack.c.0.s8 %v458
    %v460 = vlaneseq
    %v461 = vshrl.u32 %v460, 7
    %v462 = vsub.s32 %v459, %v461
    %v463 = vrot.slane %v435, %v462
    %v464 = vcombine.low %v442, %v449
    %v465 = vcombine.low %v456, %v463
    %v467 = vunpack.c.l.s4 1966171168
    %v468 = vunpack.c.0.s8 %v467
    %v469 = vlaneseq
    %v470 = vshrl.u32 %v469, 7
    %v471 = vsub.s32 %v468, %v470
    %v472 = vrot.slane %v464, %v471
    %v474 = vunpack.c.l.s4 1966171168
    %v475 = vunpack.c.0.s8 %v474
    %v476 = vlaneseq
    %v477 = vshrl.u32 %v476, 7
    %v478 = vsub.s32 %v475, %v477
    %v479 = vrot.slane %v465, %v478
    %v480 = vcombine.low %v472, %v479
    %v481 = vcombine.low %v232, %v233
    %v482 = vcombine.low %v234, %v235
    %v483 = vcombine.low %v236, %v237
    %v484 = vcombine.low %v238, %v239
    %v486 = vunpack.c.l.s4 1966171168
    %v487 = vunpack.c.0.s8 %v486
    %v488 = vlaneseq
    %v489 = vshrl.u32 %v488, 7
    %v490 = vsub.s32 %v487, %v489
    %v491 = vrot.slane %v481, %v490
    %v493 = vunpack.c.l.s4 1966171168
    %v494 = vunpack.c.0.s8 %v493
    %v495 = vlaneseq
    %v496 = vshrl.u32 %v495, 7
    %v497 = vsub.s32 %v494, %v496
    %v498 = vrot.slane %v482, %v497
    %v500 = vunpack.c.l.s4 1966171168
    %v501 = vunpack.c.0.s8 %v500
    %v502 = vlaneseq
    %v503 = vshrl.u32 %v502, 7
    %v504 = vsub.s32 %v501, %v503
    %v505 = vrot.slane %v483, %v504
    %v507 = vunpack.c.l.s4 1966171168
    %v508 = vunpack.c.0.s8 %v507
    %v509 = vlaneseq
    %v510 = vshrl.u32 %v509, 7
    %v511 = vsub.s32 %v508, %v510
    %v512 = vrot.slane %v484, %v511
    %v513 = vcombine.low %v491, %v498
    %v514 = vcombine.low %v505, %v512
    %v516 = vunpack.c.l.s4 1966171168
    %v517 = vunpack.c.0.s8 %v516
    %v518 = vlaneseq
    %v519 = vshrl.u32 %v518, 7
    %v520 = vsub.s32 %v517, %v519
    %v521 = vrot.slane %v513, %v520
    %v523 = vunpack.c.l.s4 1966171168
    %v524 = vunpack.c.0.s8 %v523
    %v525 = vlaneseq
    %v526 = vshrl.u32 %v525, 7
    %v527 = vsub.s32 %v524, %v526
    %v528 = vrot.slane %v514, %v527
    %v529 = vcombine.low %v521, %v528
    %v530 = vcombine.low %v240, %v241
    %v531 = vcombine.low %v242, %v243
    %v532 = vcombine.low %v244, %v245
    %v533 = vcombine.low %v246, %v247
    %v535 = vunpack.c.l.s4 1966171168
    %v536 = vunpack.c.0.s8 %v535
    %v537 = vlaneseq
    %v538 = vshrl.u32 %v537, 7
    %v539 = vsub.s32 %v536, %v538
    %v540 = vrot.slane %v530, %v539
    %v542 = vunpack.c.l.s4 1966171168
    %v543 = vunpack.c.0.s8 %v542
    %v544 = vlaneseq
    %v545 = vshrl.u32 %v544, 7
    %v546 = vsub.s32 %v543, %v545
    %v547 = vrot.slane %v531, %v546
    %v549 = vunpack.c.l.s4 1966171168
    %v550 = vunpack.c.0.s8 %v549
    %v551 = vlaneseq
    %v552 = vshrl.u32 %v551, 7
    %v553 = vsub.s32 %v550, %v552
    %v554 = vrot.slane %v532, %v553
    %v556 = vunpack.c.l.s4 1966171168
    %v557 = vunpack.c.0.s8 %v556
    %v558 = vlaneseq
    %v559 = vshrl.u32 %v558, 7
    %v560 = vsub.s32 %v557, %v559
    %v561 = vrot.slane %v533, %v560
    %v562 = vcombine.low %v540, %v547
    %v563 = vcombine.low %v554, %v561
    %v565 = vunpack.c.l.s4 1966171168
    %v566 = vunpack.c.0.s8 %v565
    %v567 = vlaneseq
    %v568 = vshrl.u32 %v567, 7
    %v569 = vsub.s32 %v566, %v568
    %v570 = vrot.slane %v562, %v569
    %v572 = vunpack.c.l.s4 1966171168
    %v573 = vunpack.c.0.s8 %v572
    %v574 = vlaneseq
    %v575 = vshrl.u32 %v574, 7
    %v576 = vsub.s32 %v573, %v575
    %v577 = vrot.slane %v563, %v576
    %v578 = vcombine.low %v570, %v577
    %v583 = vmul.f32 %v344, %v431
    %v584 = vmul.f32 %v346, %v480
    %v585 = vmul.f32 %v348, %v529
    %v586 = vmul.f32 %v350, %v578
    %587 = vst [vmem:[#allocation5] ss:$8 sm:$0xf] %v583
    %588 = vst [vmem:[#allocation5] ss:$8 sm:$0xf0] %v583
    %s589 = scalar_lea.vmem [#allocation5], 64
    %590 = vst [vmem:[%s589] ss:$8 sm:$0xf] %v584
    %591 = vst [vmem:[%s589] ss:$8 sm:$0xf0] %v584
    %s592 = scalar_lea.vmem [#allocation5], 128
    %593 = vst [vmem:[%s592] ss:$8 sm:$0xf] %v585
    %594 = vst [vmem:[%s592] ss:$8 sm:$0xf0] %v585
    %s595 = scalar_lea.vmem [#allocation5], 192
    %596 = vst [vmem:[%s595] ss:$8 sm:$0xf] %v586
    %597 = vst [vmem:[%s595] ss:$8 sm:$0xf0] %v586
    %v630 = vcombine.low %v312, %v313
    %v631 = vcombine.low %v314, %v315
    %v632 = vcombine.low %v316, %v317
    %v633 = vcombine.low %v318, %v319
    %v635 = vunpack.c.l.s4 1966171168
    %v636 = vunpack.c.0.s8 %v635
    %v637 = vlaneseq
    %v638 = vshrl.u32 %v637, 7
    %v639 = vsub.s32 %v636, %v638
    %v640 = vrot.slane %v630, %v639
    %v642 = vunpack.c.l.s4 1966171168
    %v643 = vunpack.c.0.s8 %v642
    %v644 = vlaneseq
    %v645 = vshrl.u32 %v644, 7
    %v646 = vsub.s32 %v643, %v645
    %v647 = vrot.slane %v631, %v646
    %v649 = vunpack.c.l.s4 1966171168
    %v650 = vunpack.c.0.s8 %v649
    %v651 = vlaneseq
    %v652 = vshrl.u32 %v651, 7
    %v653 = vsub.s32 %v650, %v652
    %v654 = vrot.slane %v632, %v653
    %v656 = vunpack.c.l.s4 1966171168
    %v657 = vunpack.c.0.s8 %v656
    %v658 = vlaneseq
    %v659 = vshrl.u32 %v658, 7
    %v660 = vsub.s32 %v657, %v659
    %v661 = vrot.slane %v633, %v660
    %v662 = vcombine.low %v640, %v647
    %v663 = vcombine.low %v654, %v661
    %v665 = vunpack.c.l.s4 1966171168
    %v666 = vunpack.c.0.s8 %v665
    %v667 = vlaneseq
    %v668 = vshrl.u32 %v667, 7
    %v669 = vsub.s32 %v666, %v668
    %v670 = vrot.slane %v662, %v669
    %v672 = vunpack.c.l.s4 1966171168
    %v673 = vunpack.c.0.s8 %v672
    %v674 = vlaneseq
    %v675 = vshrl.u32 %v674, 7
    %v676 = vsub.s32 %v673, %v675
    %v677 = vrot.slane %v663, %v676
    %v678 = vcombine.low %v670, %v677
    %v679 = vcombine.low %v320, %v321
    %v680 = vcombine.low %v322, %v323
    %v681 = vcombine.low %v324, %v325
    %v682 = vcombine.low %v326, %v327
    %v684 = vunpack.c.l.s4 1966171168
    %v685 = vunpack.c.0.s8 %v684
    %v686 = vlaneseq
    %v687 = vshrl.u32 %v686, 7
    %v688 = vsub.s32 %v685, %v687
    %v689 = vrot.slane %v679, %v688
    %v691 = vunpack.c.l.s4 1966171168
    %v692 = vunpack.c.0.s8 %v691
    %v693 = vlaneseq
    %v694 = vshrl.u32 %v693, 7
    %v695 = vsub.s32 %v692, %v694
    %v696 = vrot.slane %v680, %v695
    %v698 = vunpack.c.l.s4 1966171168
    %v699 = vunpack.c.0.s8 %v698
    %v700 = vlaneseq
    %v701 = vshrl.u32 %v700, 7
    %v702 = vsub.s32 %v699, %v701
    %v703 = vrot.slane %v681, %v702
    %v705 = vunpack.c.l.s4 1966171168
    %v706 = vunpack.c.0.s8 %v705
    %v707 = vlaneseq
    %v708 = vshrl.u32 %v707, 7
    %v709 = vsub.s32 %v706, %v708
    %v710 = vrot.slane %v682, %v709
    %v711 = vcombine.low %v689, %v696
    %v712 = vcombine.low %v703, %v710
    %v714 = vunpack.c.l.s4 1966171168
    %v715 = vunpack.c.0.s8 %v714
    %v716 = vlaneseq
    %v717 = vshrl.u32 %v716, 7
    %v718 = vsub.s32 %v715, %v717
    %v719 = vrot.slane %v711, %v718
    %v721 = vunpack.c.l.s4 1966171168
    %v722 = vunpack.c.0.s8 %v721
    %v723 = vlaneseq
    %v724 = vshrl.u32 %v723, 7
    %v725 = vsub.s32 %v722, %v724
    %v726 = vrot.slane %v712, %v725
    %v727 = vcombine.low %v719, %v726
    %v728 = vcombine.low %v328, %v329
    %v729 = vcombine.low %v330, %v331
    %v730 = vcombine.low %v332, %v333
    %v731 = vcombine.low %v334, %v335
    %v733 = vunpack.c.l.s4 1966171168
    %v734 = vunpack.c.0.s8 %v733
    %v735 = vlaneseq
    %v736 = vshrl.u32 %v735, 7
    %v737 = vsub.s32 %v734, %v736
    %v738 = vrot.slane %v728, %v737
    %v740 = vunpack.c.l.s4 1966171168
    %v741 = vunpack.c.0.s8 %v740
    %v742 = vlaneseq
    %v743 = vshrl.u32 %v742, 7
    %v744 = vsub.s32 %v741, %v743
    %v745 = vrot.slane %v729, %v744
    %v747 = vunpack.c.l.s4 1966171168
    %v748 = vunpack.c.0.s8 %v747
    %v749 = vlaneseq
    %v750 = vshrl.u32 %v749, 7
    %v751 = vsub.s32 %v748, %v750
    %v752 = vrot.slane %v730, %v751
    %v754 = vunpack.c.l.s4 1966171168
    %v755 = vunpack.c.0.s8 %v754
    %v756 = vlaneseq
    %v757 = vshrl.u32 %v756, 7
    %v758 = vsub.s32 %v755, %v757
    %v759 = vrot.slane %v731, %v758
    %v760 = vcombine.low %v738, %v745
    %v761 = vcombine.low %v752, %v759
    %v763 = vunpack.c.l.s4 1966171168
    %v764 = vunpack.c.0.s8 %v763
    %v765 = vlaneseq
    %v766 = vshrl.u32 %v765, 7
    %v767 = vsub.s32 %v764, %v766
    %v768 = vrot.slane %v760, %v767
    %v770 = vunpack.c.l.s4 1966171168
    %v771 = vunpack.c.0.s8 %v770
    %v772 = vlaneseq
    %v773 = vshrl.u32 %v772, 7
    %v774 = vsub.s32 %v771, %v773
    %v775 = vrot.slane %v761, %v774
    %v776 = vcombine.low %v768, %v775
    %v777 = vcombine.low %v336, %v337
    %v778 = vcombine.low %v338, %v339
    %v779 = vcombine.low %v340, %v341
    %v780 = vcombine.low %v342, %v343
    %v782 = vunpack.c.l.s4 1966171168
    %v783 = vunpack.c.0.s8 %v782
    %v784 = vlaneseq
    %v785 = vshrl.u32 %v784, 7
    %v786 = vsub.s32 %v783, %v785
    %v787 = vrot.slane %v777, %v786
    %v789 = vunpack.c.l.s4 1966171168
    %v790 = vunpack.c.0.s8 %v789
    %v791 = vlaneseq
    %v792 = vshrl.u32 %v791, 7
    %v793 = vsub.s32 %v790, %v792
    %v794 = vrot.slane %v778, %v793
    %v796 = vunpack.c.l.s4 1966171168
    %v797 = vunpack.c.0.s8 %v796
    %v798 = vlaneseq
    %v799 = vshrl.u32 %v798, 7
    %v800 = vsub.s32 %v797, %v799
    %v801 = vrot.slane %v779, %v800
    %v803 = vunpack.c.l.s4 1966171168
    %v804 = vunpack.c.0.s8 %v803
    %v805 = vlaneseq
    %v806 = vshrl.u32 %v805, 7
    %v807 = vsub.s32 %v804, %v806
    %v808 = vrot.slane %v780, %v807
    %v809 = vcombine.low %v787, %v794
    %v810 = vcombine.low %v801, %v808
    %v812 = vunpack.c.l.s4 1966171168
    %v813 = vunpack.c.0.s8 %v812
    %v814 = vlaneseq
    %v815 = vshrl.u32 %v814, 7
    %v816 = vsub.s32 %v813, %v815
    %v817 = vrot.slane %v809, %v816
    %v819 = vunpack.c.l.s4 1966171168
    %v820 = vunpack.c.0.s8 %v819
    %v821 = vlaneseq
    %v822 = vshrl.u32 %v821, 7
    %v823 = vsub.s32 %v820, %v822
    %v824 = vrot.slane %v810, %v823
    %v825 = vcombine.low %v817, %v824
    %v830 = vmul.f32 %v344, %v678
    %v831 = vmul.f32 %v346, %v727
    %v832 = vmul.f32 %v348, %v776
    %v833 = vmul.f32 %v350, %v825
    %s834 = scalar_lea.vmem [#allocation5], 1
    %835 = vst [vmem:[%s834] ss:$8 sm:$0xf] %v830
    %836 = vst [vmem:[%s834] ss:$8 sm:$0xf0] %v830
    %s837 = scalar_lea.vmem [#allocation5], 65
    %838 = vst [vmem:[%s837] ss:$8 sm:$0xf] %v831
    %839 = vst [vmem:[%s837] ss:$8 sm:$0xf0] %v831
    %s840 = scalar_lea.vmem [#allocation5], 129
    %841 = vst [vmem:[%s840] ss:$8 sm:$0xf] %v832
    %842 = vst [vmem:[%s840] ss:$8 sm:$0xf0] %v832
    %s843 = scalar_lea.vmem [#allocation5], 193
    %844 = vst [vmem:[%s843] ss:$8 sm:$0xf] %v833
    %845 = vst [vmem:[%s843] ss:$8 sm:$0xf0] %v833
    %s846 = scalar_lea.vmem [#allocation5], 2
    %847 = vst [vmem:[%s846] ss:$8 sm:$0xf] %v344
    %848 = vst [vmem:[%s846] ss:$8 sm:$0xf0] %v344
    %s849 = scalar_lea.vmem [#allocation5], 66
    %850 = vst [vmem:[%s849] ss:$8 sm:$0xf] %v346
    %851 = vst [vmem:[%s849] ss:$8 sm:$0xf0] %v346
    %s852 = scalar_lea.vmem [#allocation5], 130
    %853 = vst [vmem:[%s852] ss:$8 sm:$0xf] %v348
    %854 = vst [vmem:[%s852] ss:$8 sm:$0xf0] %v348
    %s855 = scalar_lea.vmem [#allocation5], 194
    %856 = vst [vmem:[%s855] ss:$8 sm:$0xf] %v350
    %857 = vst [vmem:[%s855] ss:$8 sm:$0xf0] %v350
    %s858 = scalar_lea.vmem [#allocation5], 3
    %859 = vst [vmem:[%s858] ss:$8 sm:$0xf] 1.0
    %860 = vst [vmem:[%s858] ss:$8 sm:$0xf0] 1.0
    %s861 = scalar_lea.vmem [#allocation5], 67
    %862 = vst [vmem:[%s861] ss:$8 sm:$0xf] 1.0
    %863 = vst [vmem:[%s861] ss:$8 sm:$0xf0] 1.0
    %s864 = scalar_lea.vmem [#allocation5], 131
    %865 = vst [vmem:[%s864] ss:$8 sm:$0xf] 1.0
    %866 = vst [vmem:[%s864] ss:$8 sm:$0xf0] 1.0
    %s867 = scalar_lea.vmem [#allocation5], 195
    %868 = vst [vmem:[%s867] ss:$8 sm:$0xf] 1.0
    %869 = vst [vmem:[%s867] ss:$8 sm:$0xf0] 1.0
    %s870 = scalar_lea.vmem [#allocation2], 1
    %v871 = vld [vmem:[%s870] ss:$2 sm:$0xff]
    %s872 = scalar_lea.vmem [#allocation2], 17
    %v873 = vld [vmem:[%s872] ss:$2 sm:$0xff]
    %s874 = scalar_lea.vmem [#allocation2], 33
    %v875 = vld [vmem:[%s874] ss:$2 sm:$0xff]
    %s876 = scalar_lea.vmem [#allocation2], 49
    %v877 = vld [vmem:[%s876] ss:$2 sm:$0xff]
    %v878 = vmul.f32 %v871, %v431
    %v879 = vmul.f32 %v873, %v480
    %v880 = vmul.f32 %v875, %v529
    %v881 = vmul.f32 %v877, %v578
    %s882 = scalar_lea.vmem [#allocation5], 4
    %883 = vst [vmem:[%s882] ss:$8 sm:$0xf] %v878
    %884 = vst [vmem:[%s882] ss:$8 sm:$0xf0] %v878
    %s885 = scalar_lea.vmem [#allocation5], 68
    %886 = vst [vmem:[%s885] ss:$8 sm:$0xf] %v879
    %887 = vst [vmem:[%s885] ss:$8 sm:$0xf0] %v879
    %s888 = scalar_lea.vmem [#allocation5], 132
    %889 = vst [vmem:[%s888] ss:$8 sm:$0xf] %v880
    %890 = vst [vmem:[%s888] ss:$8 sm:$0xf0] %v880
    %s891 = scalar_lea.vmem [#allocation5], 196
    %892 = vst [vmem:[%s891] ss:$8 sm:$0xf] %v881
    %893 = vst [vmem:[%s891] ss:$8 sm:$0xf0] %v881
    %v894 = vmul.f32 %v871, %v678
    %v895 = vmul.f32 %v873, %v727
    %v896 = vmul.f32 %v875, %v776
    %v897 = vmul.f32 %v877, %v825
    %s898 = scalar_lea.vmem [#allocation5], 5
    %899 = vst [vmem:[%s898] ss:$8 sm:$0xf] %v894
    %900 = vst [vmem:[%s898] ss:$8 sm:$0xf0] %v894
    %s901 = scalar_lea.vmem [#allocation5], 69
    %902 = vst [vmem:[%s901] ss:$8 sm:$0xf] %v895
    %903 = vst [vmem:[%s901] ss:$8 sm:$0xf0] %v895
    %s904 = scalar_lea.vmem [#allocation5], 133
    %905 = vst [vmem:[%s904] ss:$8 sm:$0xf] %v896
    %906 = vst [vmem:[%s904] ss:$8 sm:$0xf0] %v896
    %s907 = scalar_lea.vmem [#allocation5], 197
    %908 = vst [vmem:[%s907] ss:$8 sm:$0xf] %v897
    %909 = vst [vmem:[%s907] ss:$8 sm:$0xf0] %v897
    %s910 = scalar_lea.vmem [#allocation5], 6
    %911 = vst [vmem:[%s910] ss:$8 sm:$0xf] %v871
    %912 = vst [vmem:[%s910] ss:$8 sm:$0xf0] %v871
    %s913 = scalar_lea.vmem [#allocation5], 70
    %914 = vst [vmem:[%s913] ss:$8 sm:$0xf] %v873
    %915 = vst [vmem:[%s913] ss:$8 sm:$0xf0] %v873
    %s916 = scalar_lea.vmem [#allocation5], 134
    %917 = vst [vmem:[%s916] ss:$8 sm:$0xf] %v875
    %918 = vst [vmem:[%s916] ss:$8 sm:$0xf0] %v875
    %s919 = scalar_lea.vmem [#allocation5], 198
    %920 = vst [vmem:[%s919] ss:$8 sm:$0xf] %v877
    %921 = vst [vmem:[%s919] ss:$8 sm:$0xf0] %v877
    %s922 = scalar_lea.vmem [#allocation5], 7
    %923 = vst [vmem:[%s922] ss:$8 sm:$0xf] 1.0
    %924 = vst [vmem:[%s922] ss:$8 sm:$0xf0] 1.0
    %s925 = scalar_lea.vmem [#allocation5], 71
    %926 = vst [vmem:[%s925] ss:$8 sm:$0xf] 1.0
    %927 = vst [vmem:[%s925] ss:$8 sm:$0xf0] 1.0
    %s928 = scalar_lea.vmem [#allocation5], 135
    %929 = vst [vmem:[%s928] ss:$8 sm:$0xf] 1.0
    %930 = vst [vmem:[%s928] ss:$8 sm:$0xf0] 1.0
    %s931 = scalar_lea.vmem [#allocation5], 199
    %932 = vst [vmem:[%s931] ss:$8 sm:$0xf] 1.0
    %933 = vst [vmem:[%s931] ss:$8 sm:$0xf0] 1.0
    // Predicated region
    $region10: #{tpu_custom_call.1} parent=1 // pred_check
      _
    $region11: #{tpu_custom_call.1} parent=1 // pred_check_branch
      %935 = sbr.rel (0) target = $region13
    $region12: #{tpu_custom_call.1} parent=1 // pred_region
      %s937 = ssub.s32 4096, 4096
      %938 = vsyncadd [#allocation4], %s937
      %s940 = sshll.u32 [#allocation5], 4
      %s941 = int_to_ptr.vmem [resolvable:$true] %s940
      %943 = dma.vmem_to_hbm [thread:$0]  %s941, 4096, %s1, [#allocation4]
    $region13: #{tpu_custom_call.1} parent=1 // pred_fallthru
      _
    // Predicated region
    $region14: #{tpu_custom_call.1} parent=1 // pred_check
      _
    $region15: #{tpu_custom_call.1} parent=1 // pred_check_branch
      %945 = sbr.rel (0) target = $region17
    $region16: #{tpu_custom_call.1} parent=1 // pred_region
      %946 = dma.done [#allocation4], 4096
    $region17: #{tpu_custom_call.1} parent=1 // pred_fallthru
      _
    %947 = vsyncpa [#allocation3], 1
    %948 = vsyncpa [#allocation4], 1

</llo_original>
